<compile_context>
chip_gen: v7x
topology: tpu7x:2x2x1
jax: 0.10.0
libtpu: 0.0.40
codegen_flags: <defaults>
</compile_context>

<pallas_src>
import jax
import jax.numpy as jnp
from jax import lax
from jax.experimental import pallas as pl
from jax.experimental.pallas import tpu as pltpu

ALPHA = 0.01  # default alpha of Cross_Modal_Affinity_Loss


def _cmaf_kernel(w_ref, lab_col_ref, lab_row_ref, feats_ref, scores_ref,
                 out_ref, sq_t_ref, sq_v_ref, ce_num, ce_den, trip_sum, cma_sum):
    i = pl.program_id(0)
    nsteps = pl.num_programs(0)
    tm = lab_col_ref.shape[0]          # rows of the batch handled this step
    two_n, d = feats_ref.shape
    n = two_n // 2
    c = scores_ref.shape[1]

    # ---------------- one-time init: accumulators + column norms -------------
    @pl.when(i == 0)
    def _init():
        ce_num[...] = jnp.zeros_like(ce_num)
        ce_den[...] = jnp.zeros_like(ce_den)
        trip_sum[...] = jnp.zeros_like(trip_sum)
        cma_sum[...] = jnp.zeros_like(cma_sum)
        feats_f32 = feats_ref[...].astype(jnp.float32)        # (2N, D)
        fsq = feats_f32 * feats_f32
        ones_row = jnp.ones((1, d), jnp.float32)
        # squared norms of ALL samples, laid out as (1, N) row vectors via a
        # ones-matvec on the MXU (avoids an in-kernel transpose / XLU reduce).
        sq_t_ref[...] = lax.dot_general(ones_row, fsq[0:n, :],
                                        (((1,), (1,)), ((), ())),
                                        preferred_element_type=jnp.float32)
        sq_v_ref[...] = lax.dot_general(ones_row, fsq[n:two_n, :],
                                        (((1,), (1,)), ((), ())),
                                        preferred_element_type=jnp.float32)

    lab_col = lab_col_ref[...]                                # (TM, 1) int32
    lab_row = lab_row_ref[...]                                # (1, N)  int32

    # ---------------- cross entropy (ignore_index=0) over this row block -----
    logits = scores_ref[...].astype(jnp.float32)              # (TM, C)
    m = jnp.max(logits, axis=1, keepdims=True)
    lse = m + jnp.log(jnp.sum(jnp.exp(logits - m), axis=1, keepdims=True))
    class_ids = lax.broadcasted_iota(jnp.int32, (tm, c), 1)
    picked = jnp.sum(jnp.where(class_ids == lab_col, logits, 0.0),
                     axis=1, keepdims=True)                   # (TM, 1)
    valid = (lab_col != 0).astype(jnp.float32)                # (TM, 1)
    ce_num[...] += jnp.sum((lse - picked) * valid, keepdims=True)
    ce_den[...] += jnp.sum(valid, keepdims=True)

    # ---------------- Gram blocks: 2 MXU matmuls, FLOP-minimal ---------------
    row0 = pl.multiple_of(i * tm, 8)
    t_blk = feats_ref[pl.ds(row0, tm), :]                     # (TM, D) native dtype
    v_blk = feats_ref[pl.ds(n + row0, tm), :]                 # (TM, D)
    # text rows against ALL samples -> yields text-text and text-vision blocks.
    g_t = lax.dot_general(t_blk, feats_ref[...], (((1,), (1,)), ((), ())),
                          preferred_element_type=jnp.float32)  # (TM, 2N) f32
    g_tt = g_t[:, 0:n]                 # text rows   x text cols
    g_tv = g_t[:, n:two_n]             # text rows   x vision cols
    # vision rows against vision samples only (vision-text block never needed).
    g_vv = lax.dot_general(v_blk, feats_ref[pl.ds(n, n), :],
                           (((1,), (1,)), ((), ())),
                           preferred_element_type=jnp.float32)  # (TM, N) f32

    # squared row norms of the block, computed directly (not from Gram diag)
    t32 = t_blk.astype(jnp.float32)
    v32 = v_blk.astype(jnp.float32)
    sq_t_col = jnp.sum(t32 * t32, axis=1, keepdims=True)      # (TM, 1)
    sq_v_col = jnp.sum(v32 * v32, axis=1, keepdims=True)      # (TM, 1)
    sq_t_row = sq_t_ref[...]                                  # (1, N)
    sq_v_row = sq_v_ref[...]                                  # (1, N)

    # ---------------- batch-hard triplet hinge (MarginRankingLoss margin=0) --
    same = lab_col == lab_row                                 # (TM, N)

    def _hinge_sum(g_blk, sq_c, sq_r):
        dist = jnp.sqrt(jnp.maximum(sq_c + sq_r - 2.0 * g_blk, 1e-12))
        d_ap = jnp.max(jnp.where(same, dist, -1e30), axis=1, keepdims=True)
        d_an = jnp.min(jnp.where(same, 1e30, dist), axis=1, keepdims=True)
        return jnp.sum(jnp.maximum(d_ap - d_an, 0.0), keepdims=True)

    trip_sum[...] += (_hinge_sum(g_tt, sq_t_col, sq_t_row)
                      + _hinge_sum(g_vv, sq_v_col, sq_v_row))

    # ---------------- cross-modal affinity sums as MXU bilinear forms --------
    # cos[i,j] = g_tv[i,j] * rsqrt(|t_i|^2) * rsqrt(|v_j|^2); the plus/sub masks
    # are separable in rows/cols, so fold mask + rsqrt into weight vectors and
    # evaluate a^T (G b) with two tiny matvecs (no cosine matrix materialised).
    rsq_t_col = lax.rsqrt(sq_t_col)                           # (TM, 1)
    rsq_v_row = lax.rsqrt(sq_v_row)                           # (1, N)
    pos_r = lab_col != 0
    pos_c = lab_row != 0
    a_plus = jnp.where(pos_r, rsq_t_col, 0.0)
    a_sub = jnp.where(pos_r, 0.0, rsq_t_col)
    b_plus = jnp.where(pos_c, rsq_v_row, 0.0)
    b_sub = jnp.where(pos_c, 0.0, rsq_v_row)
    gb_plus = lax.dot_general(g_tv, b_plus, (((1,), (1,)), ((), ())),
                              preferred_element_type=jnp.float32)   # (TM, 1)
    gb_sub = lax.dot_general(g_tv, b_sub, (((1,), (1,)), ((), ())),
                             preferred_element_type=jnp.float32)    # (TM, 1)
    cma_sum[...] += jnp.sum(gb_plus * a_plus + gb_sub * a_sub, keepdims=True)

    # ---------------- finalize on the last row block --------------------------
    @pl.when(i == nsteps - 1)
    def _finalize():
        den = jnp.maximum(ce_den[...], 1.0)     # guard all-ignored batch (0/0)
        ce = ce_num[...] / den
        triplet = trip_sum[...] * (1.0 / n)
        # TODO(synk): the reference Cross_Modal_Affinity_Loss is not executable
        # PyTorch (iterates range(tensor), python max() on tensors); we keep the
        # mask-partitioned, sum-reduced hinge reading (sum(i2t)==sum(t2i)).
        cma = 2.0 * jnp.maximum(ALPHA - cma_sum[...], 0.0)
        total = w_ref[0] * ce + w_ref[1] * triplet + w_ref[2] * cma
        out_ref[...] = total.astype(jnp.float32)


def cmaf_loss(text_features, vision_features, labels, scores, w_param,
              block_rows=None):
    n, d_feat = text_features.shape
    c = scores.shape[1]
    assert vision_features.shape == (n, d_feat)
    assert n % 8 == 0, "batch size must be a multiple of 8 (pad with label==0)"
    if block_rows is None:
        block_rows = 128 if n % 128 == 0 else n   # lane/sublane friendly default
    assert n % block_rows == 0 and block_rows % 8 == 0
    tm = block_rows

    # parameter glue: softmax over the 3 learned weights (3 scalars)
    ew = jnp.exp(w_param.astype(jnp.float32))
    weights = ew / jnp.sum(ew)

    lab_col = labels.reshape(n, 1).astype(jnp.int32)
    lab_row = labels.reshape(1, n).astype(jnp.int32)
    # features stay in their NATIVE dtype (bf16 welcome) -> half the DMA bytes
    feats = jnp.concatenate([text_features, vision_features], axis=0)  # (2N, D)

    grid_spec = pltpu.PrefetchScalarGridSpec(
        num_scalar_prefetch=0,
        grid=(n // tm,),
        in_specs=[
            pl.BlockSpec(memory_space=pltpu.MemorySpace.SMEM),   # softmax(w) (3,)
            pl.BlockSpec((tm, 1), lambda i: (i, 0)),             # labels column block
            pl.BlockSpec((1, n), lambda i: (0, 0)),              # labels row (resident)
            pl.BlockSpec((2 * n, d_feat), lambda i: (0, 0)),     # stacked feats (resident)
            pl.BlockSpec((tm, c), lambda i: (i, 0)),             # scores block
        ],
        out_specs=pl.BlockSpec((1, 1), lambda i: (0, 0)),
        scratch_shapes=[
            pltpu.VMEM((1, n), jnp.float32),   # ||text_j||^2   (row vector)
            pltpu.VMEM((1, n), jnp.float32),   # ||vision_j||^2 (row vector)
            pltpu.VMEM((1, 1), jnp.float32),   # CE numerator
            pltpu.VMEM((1, 1), jnp.float32),   # CE denominator (# valid labels)
            pltpu.VMEM((1, 1), jnp.float32),   # triplet hinge sum
            pltpu.VMEM((1, 1), jnp.float32),   # affinity cosine sum (plus + sub)
        ],
    )
    out = pl.pallas_call(
        _cmaf_kernel,
        out_shape=jax.ShapeDtypeStruct((1, 1), jnp.float32),
        grid_spec=grid_spec,
        compiler_params=pltpu.CompilerParams(
            dimension_semantics=("arbitrary",),       # sequential reduction grid
            vmem_limit_bytes=64 * 1024 * 1024,        # fits v7x, lifts v5e/v6e defaults
        ),
    )(weights, lab_col, lab_row, feats, scores)
    return out[0, 0]


def cmaf_loss_ref(text, vision, labels, scores, w_param):
    """Pure-JAX reference mirroring the kernel semantics (for verification)."""
    text = text.astype(jnp.float32)
    vision = vision.astype(jnp.float32)
    scores = scores.astype(jnp.float32)
    ew = jnp.exp(w_param.astype(jnp.float32))
    w1, w2, w3 = ew / jnp.sum(ew)

    # cross entropy, ignore_index=0 (denominator guarded like the kernel)
    logp = scores - jax.scipy.special.logsumexp(scores, axis=1, keepdims=True)
    nll = -jnp.take_along_axis(logp, labels[:, None], axis=1)[:, 0]
    valid = (labels != 0).astype(jnp.float32)
    ce = jnp.sum(nll * valid) / jnp.maximum(jnp.sum(valid), 1.0)

    same = labels[:, None] == labels[None, :]

    def trip(x):
        sq = jnp.sum(x * x, axis=1, keepdims=True)
        dist = jnp.sqrt(jnp.maximum(sq + sq.T - 2.0 * x @ x.T, 1e-12))
        d_ap = jnp.max(jnp.where(same, dist, -jnp.inf), axis=1)
        d_an = jnp.min(jnp.where(same, jnp.inf, dist), axis=1)
        return jnp.mean(jnp.maximum(d_ap - d_an, 0.0))

    triplet = trip(text) + trip(vision)

    tn = text / jnp.linalg.norm(text, axis=1, keepdims=True)
    vn = vision / jnp.linalg.norm(vision, axis=1, keepdims=True)
    cos = tn @ vn.T
    plus = (labels[:, None] != 0) & (labels[None, :] != 0)
    sub = (labels[:, None] == 0) & (labels[None, :] == 0)
    sp = jnp.sum(jnp.where(plus, cos, 0.0))
    ss = jnp.sum(jnp.where(sub, cos, 0.0))
    cma = 2.0 * jnp.maximum(ALPHA - sp - ss, 0.0)
    return w1 * ce + w2 * triplet + w3 * cma


if __name__ == "__main__":
    N, D, C = 8, 32, 5
    key = jax.random.PRNGKey(0)
    k1, k2, k3 = jax.random.split(key, 3)
    text_features = jax.random.normal(k1, (N, D), dtype=jnp.float32)
    vision_features = jax.random.normal(k2, (N, D), dtype=jnp.float32)
    scores = jax.random.normal(k3, (N, C), dtype=jnp.float32)
    # include both label==0 ("sub"/ignored) and nonzero ("plus") classes
    labels = jnp.array([0, 1, 2, 0, 3, 1, 0, 2], dtype=jnp.int32)
    w_param = jnp.ones((3,), dtype=jnp.float32)   # nn.Parameter(torch.ones(3))

    out = jax.block_until_ready(
        cmaf_loss(text_features, vision_features, labels, scores, w_param))
    ref = jax.block_until_ready(
        cmaf_loss_ref(text_features, vision_features, labels, scores, w_param))

    assert jnp.isfinite(out), "kernel produced non-finite loss"
    assert jnp.allclose(out, ref, rtol=1e-4, atol=1e-4), (out, ref)
    print("KERNEL_OK")
</pallas_src>

<mosaic_0001>
module attributes {stable_mosaic.version = 11 : i64} {
  func.func @_cmaf_kernel(%arg0: i32, %arg1: memref<3xf32, #tpu.memory_space<smem>>, %arg2: memref<8x1xi32, #tpu.memory_space<vmem>>, %arg3: memref<1x8xi32, #tpu.memory_space<vmem>>, %arg4: memref<16x32xf32, #tpu.memory_space<vmem>>, %arg5: memref<8x5xf32, #tpu.memory_space<vmem>>, %arg6: memref<1x1xf32, #tpu.memory_space<vmem>>, %arg7: memref<1x8xf32, #tpu.memory_space<vmem>>, %arg8: memref<1x8xf32, #tpu.memory_space<vmem>>, %arg9: memref<1x1xf32, #tpu.memory_space<vmem>>, %arg10: memref<1x1xf32, #tpu.memory_space<vmem>>, %arg11: memref<1x1xf32, #tpu.memory_space<vmem>>, %arg12: memref<1x1xf32, #tpu.memory_space<vmem>>) attributes {dimension_semantics = [#tpu.dimension_semantics<arbitrary>], iteration_bounds = array<i64: 1>, scalar_prefetch = 0 : i64, scratch_operands = 6 : i64, tpu.core_type = #tpu.core_type<tc>, window_params = [{transform_indices = @transform_0, window_bounds = array<i64: 3>}, {transform_indices = @transform_1, window_bounds = array<i64: 8, 1>}, {pipeline_mode = #tpu.pipeline_mode<synchronous>, transform_indices = @transform_2, window_bounds = array<i64: 1, 8>}, {pipeline_mode = #tpu.pipeline_mode<synchronous>, transform_indices = @transform_3, window_bounds = array<i64: 16, 32>}, {transform_indices = @transform_4, window_bounds = array<i64: 8, 5>}, {pipeline_mode = #tpu.pipeline_mode<synchronous>, transform_indices = @transform_5, window_bounds = array<i64: 1, 1>}]} {
    %c0_i32 = arith.constant 0 : i32
    %0 = arith.cmpi eq, %arg0, %c0_i32 : i32
    %1 = arith.extui %0 : i1 to i32
    %c0_i32_0 = arith.constant 0 : i32
    %2 = arith.cmpi ne, %1, %c0_i32_0 : i32
    scf.if %2 {
      %cst_69 = arith.constant 0.000000e+00 : f32
      %152 = vector.broadcast %cst_69 : f32 to vector<1x1xf32>
      %c0_70 = arith.constant 0 : index
      %c0_71 = arith.constant 0 : index
      %153 = vector.load %arg9[%c0_70, %c0_71] : memref<1x1xf32, #tpu.memory_space<vmem>>, vector<1x1xf32>
      tpu.vector_store %arg9[%c0_70, %c0_71], %152 {strides = array<i32>} : memref<1x1xf32, #tpu.memory_space<vmem>>, vector<1x1xf32>,
      %cst_72 = arith.constant 0.000000e+00 : f32
      %154 = vector.broadcast %cst_72 : f32 to vector<1x1xf32>
      %c0_73 = arith.constant 0 : index
      %c0_74 = arith.constant 0 : index
      %155 = vector.load %arg10[%c0_73, %c0_74] : memref<1x1xf32, #tpu.memory_space<vmem>>, vector<1x1xf32>
      tpu.vector_store %arg10[%c0_73, %c0_74], %154 {strides = array<i32>} : memref<1x1xf32, #tpu.memory_space<vmem>>, vector<1x1xf32>,
      %cst_75 = arith.constant 0.000000e+00 : f32
      %156 = vector.broadcast %cst_75 : f32 to vector<1x1xf32>
      %c0_76 = arith.constant 0 : index
      %c0_77 = arith.constant 0 : index
      %157 = vector.load %arg11[%c0_76, %c0_77] : memref<1x1xf32, #tpu.memory_space<vmem>>, vector<1x1xf32>
      tpu.vector_store %arg11[%c0_76, %c0_77], %156 {strides = array<i32>} : memref<1x1xf32, #tpu.memory_space<vmem>>, vector<1x1xf32>,
      %cst_78 = arith.constant 0.000000e+00 : f32
      %158 = vector.broadcast %cst_78 : f32 to vector<1x1xf32>
      %c0_79 = arith.constant 0 : index
      %c0_80 = arith.constant 0 : index
      %159 = vector.load %arg12[%c0_79, %c0_80] : memref<1x1xf32, #tpu.memory_space<vmem>>, vector<1x1xf32>
      tpu.vector_store %arg12[%c0_79, %c0_80], %158 {strides = array<i32>} : memref<1x1xf32, #tpu.memory_space<vmem>>, vector<1x1xf32>,
      %c0_81 = arith.constant 0 : index
      %c0_82 = arith.constant 0 : index
      %160 = vector.load %arg4[%c0_81, %c0_82] : memref<16x32xf32, #tpu.memory_space<vmem>>, vector<16x32xf32>
      %161 = arith.mulf %160, %160 : vector<16x32xf32>
      %cst_83 = arith.constant 1.000000e+00 : f32
      %162 = vector.broadcast %cst_83 : f32 to vector<1x32xf32>
      %163 = vector.extract_strided_slice %161 {offsets = [0, 0], sizes = [8, 32], strides = [1, 1]} : vector<16x32xf32> to vector<8x32xf32>
      %cst_84 = arith.constant dense<0.000000e+00> : vector<1x8xf32>
      %164 = tpu.matmul %162, %163, %cst_84 {dimension_numbers = #tpu.dot_dimension_numbers<[1], [1], [0], [0], [0, 0, 1, 0], [], []>} : vector<1x32xf32>, vector<8x32xf32>, vector<1x8xf32> -> vector<1x8xf32>
      %c0_85 = arith.constant 0 : index
      %c0_86 = arith.constant 0 : index
      %165 = vector.load %arg7[%c0_85, %c0_86] : memref<1x8xf32, #tpu.memory_space<vmem>>, vector<1x8xf32>
      tpu.vector_store %arg7[%c0_85, %c0_86], %164 {strides = array<i32>} : memref<1x8xf32, #tpu.memory_space<vmem>>, vector<1x8xf32>,
      %166 = vector.extract_strided_slice %161 {offsets = [8, 0], sizes = [8, 32], strides = [1, 1]} : vector<16x32xf32> to vector<8x32xf32>
      %cst_87 = arith.constant dense<0.000000e+00> : vector<1x8xf32>
      %167 = tpu.matmul %162, %166, %cst_87 {dimension_numbers = #tpu.dot_dimension_numbers<[1], [1], [0], [0], [0, 0, 1, 0], [], []>} : vector<1x32xf32>, vector<8x32xf32>, vector<1x8xf32> -> vector<1x8xf32>
      %c0_88 = arith.constant 0 : index
      %c0_89 = arith.constant 0 : index
      %168 = vector.load %arg8[%c0_88, %c0_89] : memref<1x8xf32, #tpu.memory_space<vmem>>, vector<1x8xf32>
      tpu.vector_store %arg8[%c0_88, %c0_89], %167 {strides = array<i32>} : memref<1x8xf32, #tpu.memory_space<vmem>>, vector<1x8xf32>,
    } else {
    }
    %c0 = arith.constant 0 : index
    %c0_1 = arith.constant 0 : index
    %3 = vector.load %arg2[%c0, %c0_1] : memref<8x1xi32, #tpu.memory_space<vmem>>, vector<8x1xi32>
    %c0_2 = arith.constant 0 : index
    %c0_3 = arith.constant 0 : index
    %4 = vector.load %arg3[%c0_2, %c0_3] : memref<1x8xi32, #tpu.memory_space<vmem>>, vector<1x8xi32>
    %c0_4 = arith.constant 0 : index
    %c0_5 = arith.constant 0 : index
    %5 = vector.load %arg5[%c0_4, %c0_5] : memref<8x5xf32, #tpu.memory_space<vmem>>, vector<8x5xf32>
    %cst = arith.constant dense<0xFF800000> : vector<8xf32>
    %6 = vector.multi_reduction <maximumf>, %5, %cst [1] : vector<8x5xf32> to vector<8xf32>
    %7 = vector.shape_cast %6 : vector<8xf32> to vector<8x1xf32>
    %8 = vector.broadcast %7 : vector<8x1xf32> to vector<8x5xf32>
    %9 = arith.subf %5, %8 : vector<8x5xf32>
    %10 = math.exp %9 : vector<8x5xf32>
    %cst_6 = arith.constant dense<0.000000e+00> : vector<8xf32>
    %11 = vector.multi_reduction <add>, %10, %cst_6 [1] : vector<8x5xf32> to vector<8xf32>
    %12 = vector.shape_cast %11 : vector<8xf32> to vector<8x1xf32>
    %13 = math.log %12 : vector<8x1xf32>
    %14 = arith.addf %7, %13 : vector<8x1xf32>
    %15 = tpu.iota {dimensions = array<i32: 1>} : vector<8x5xi32>
    %16 = vector.broadcast %3 : vector<8x1xi32> to vector<8x5xi32>
    %17 = arith.cmpi eq, %15, %16 : vector<8x5xi32>
    %cst_7 = arith.constant 0.000000e+00 : f32
    %18 = vector.broadcast %cst_7 : f32 to vector<8x5xf32>
    %19 = arith.select %17, %5, %18 : vector<8x5xi1>, vector<8x5xf32>
    %cst_8 = arith.constant dense<0.000000e+00> : vector<8xf32>
    %20 = vector.multi_reduction <add>, %19, %cst_8 [1] : vector<8x5xf32> to vector<8xf32>
    %21 = vector.shape_cast %20 : vector<8xf32> to vector<8x1xf32>
    %c0_i32_9 = arith.constant 0 : i32
    %22 = vector.broadcast %c0_i32_9 : i32 to vector<8x1xi32>
    %23 = arith.cmpi ne, %3, %22 : vector<8x1xi32>
    %24 = arith.extui %23 : vector<8x1xi1> to vector<8x1xi32>
    %25 = arith.sitofp %24 : vector<8x1xi32> to vector<8x1xf32>
    %c0_10 = arith.constant 0 : index
    %c0_11 = arith.constant 0 : index
    %26 = vector.load %arg9[%c0_10, %c0_11] : memref<1x1xf32, #tpu.memory_space<vmem>>, vector<1x1xf32>
    %27 = arith.subf %14, %21 : vector<8x1xf32>
    %28 = arith.mulf %27, %25 : vector<8x1xf32>
    %29 = vector.shape_cast %28 : vector<8x1xf32> to vector<1x8x1xf32>
    %cst_12 = arith.constant dense<0.000000e+00> : vector<1xf32>
    %30 = vector.multi_reduction <add>, %29, %cst_12 [1, 2] : vector<1x8x1xf32> to vector<1xf32>
    %31 = vector.shape_cast %30 : vector<1xf32> to vector<1x1x1xf32>
    %32 = vector.extract %31[0, 0, 0] : f32 from vector<1x1x1xf32>
    %33 = vector.broadcast %32 : f32 to vector<1x1xf32>
    %34 = arith.addf %26, %33 : vector<1x1xf32>
    %c0_13 = arith.constant 0 : index
    %c0_14 = arith.constant 0 : index
    %35 = vector.load %arg9[%c0_13, %c0_14] : memref<1x1xf32, #tpu.memory_space<vmem>>, vector<1x1xf32>
    tpu.vector_store %arg9[%c0_13, %c0_14], %34 {strides = array<i32>} : memref<1x1xf32, #tpu.memory_space<vmem>>, vector<1x1xf32>,
    %c0_15 = arith.constant 0 : index
    %c0_16 = arith.constant 0 : index
    %36 = vector.load %arg10[%c0_15, %c0_16] : memref<1x1xf32, #tpu.memory_space<vmem>>, vector<1x1xf32>
    %37 = vector.shape_cast %25 : vector<8x1xf32> to vector<1x8x1xf32>
    %cst_17 = arith.constant dense<0.000000e+00> : vector<1xf32>
    %38 = vector.multi_reduction <add>, %37, %cst_17 [1, 2] : vector<1x8x1xf32> to vector<1xf32>
    %39 = vector.shape_cast %38 : vector<1xf32> to vector<1x1x1xf32>
    %40 = vector.extract %39[0, 0, 0] : f32 from vector<1x1x1xf32>
    %41 = vector.broadcast %40 : f32 to vector<1x1xf32>
    %42 = arith.addf %36, %41 : vector<1x1xf32>
    %c0_18 = arith.constant 0 : index
    %c0_19 = arith.constant 0 : index
    %43 = vector.load %arg10[%c0_18, %c0_19] : memref<1x1xf32, #tpu.memory_space<vmem>>, vector<1x1xf32>
    tpu.vector_store %arg10[%c0_18, %c0_19], %42 {strides = array<i32>} : memref<1x1xf32, #tpu.memory_space<vmem>>, vector<1x1xf32>,
    %c8_i32 = arith.constant 8 : i32
    %44 = arith.muli %arg0, %c8_i32 : i32
    %45 = tpu.assume_multiple %44, 8 : i32
    %46 = arith.index_cast %45 : i32 to index
    %c0_20 = arith.constant 0 : index
    %47 = vector.load %arg4[%46, %c0_20] : memref<16x32xf32, #tpu.memory_space<vmem>>, vector<8x32xf32>
    %c8_i32_21 = arith.constant 8 : i32
    %48 = arith.addi %c8_i32_21, %45 : i32
    %49 = arith.index_cast %48 : i32 to index
    %c0_22 = arith.constant 0 : index
    %50 = vector.load %arg4[%49, %c0_22] : memref<16x32xf32, #tpu.memory_space<vmem>>, vector<8x32xf32>
    %c0_23 = arith.constant 0 : index
    %c0_24 = arith.constant 0 : index
    %51 = vector.load %arg4[%c0_23, %c0_24] : memref<16x32xf32, #tpu.memory_space<vmem>>, vector<16x32xf32>
    %cst_25 = arith.constant dense<0.000000e+00> : vector<8x16xf32>
    %52 = tpu.matmul %47, %51, %cst_25 {dimension_numbers = #tpu.dot_dimension_numbers<[1], [1], [0], [0], [0, 0, 1, 0], [], []>} : vector<8x32xf32>, vector<16x32xf32>, vector<8x16xf32> -> vector<8x16xf32>
    %53 = vector.extract_strided_slice %52 {offsets = [0, 0], sizes = [8, 8], strides = [1, 1]} : vector<8x16xf32> to vector<8x8xf32>
    %54 = vector.extract_strided_slice %52 {offsets = [0, 8], sizes = [8, 8], strides = [1, 1]} : vector<8x16xf32> to vector<8x8xf32>
    %c8 = arith.constant 8 : index
    %c0_26 = arith.constant 0 : index
    %55 = vector.load %arg4[%c8, %c0_26] : memref<16x32xf32, #tpu.memory_space<vmem>>, vector<8x32xf32>
    %cst_27 = arith.constant dense<0.000000e+00> : vector<8x8xf32>
    %56 = tpu.matmul %50, %55, %cst_27 {dimension_numbers = #tpu.dot_dimension_numbers<[1], [1], [0], [0], [0, 0, 1, 0], [], []>} : vector<8x32xf32>, vector<8x32xf32>, vector<8x8xf32> -> vector<8x8xf32>
    %57 = arith.mulf %47, %47 : vector<8x32xf32>
    %cst_28 = arith.constant dense<0.000000e+00> : vector<8xf32>
    %58 = vector.multi_reduction <add>, %57, %cst_28 [1] : vector<8x32xf32> to vector<8xf32>
    %59 = vector.shape_cast %58 : vector<8xf32> to vector<8x1xf32>
    %60 = arith.mulf %50, %50 : vector<8x32xf32>
    %cst_29 = arith.constant dense<0.000000e+00> : vector<8xf32>
    %61 = vector.multi_reduction <add>, %60, %cst_29 [1] : vector<8x32xf32> to vector<8xf32>
    %62 = vector.shape_cast %61 : vector<8xf32> to vector<8x1xf32>
    %c0_30 = arith.constant 0 : index
    %c0_31 = arith.constant 0 : index
    %63 = vector.load %arg7[%c0_30, %c0_31] : memref<1x8xf32, #tpu.memory_space<vmem>>, vector<1x8xf32>
    %c0_32 = arith.constant 0 : index
    %c0_33 = arith.constant 0 : index
    %64 = vector.load %arg8[%c0_32, %c0_33] : memref<1x8xf32, #tpu.memory_space<vmem>>, vector<1x8xf32>
    %65 = vector.broadcast %3 : vector<8x1xi32> to vector<8x8xi32>
    %66 = vector.broadcast %4 : vector<1x8xi32> to vector<8x8xi32>
    %67 = arith.cmpi eq, %65, %66 : vector<8x8xi32>
    %c0_34 = arith.constant 0 : index
    %c0_35 = arith.constant 0 : index
    %68 = vector.load %arg11[%c0_34, %c0_35] : memref<1x1xf32, #tpu.memory_space<vmem>>, vector<1x1xf32>
    %69 = vector.broadcast %59 : vector<8x1xf32> to vector<8x8xf32>
    %70 = vector.broadcast %63 : vector<1x8xf32> to vector<8x8xf32>
    %71 = arith.addf %69, %70 : vector<8x8xf32>
    %cst_36 = arith.constant 2.000000e+00 : f32
    %72 = vector.broadcast %cst_36 : f32 to vector<8x8xf32>
    %73 = arith.mulf %72, %53 : vector<8x8xf32>
    %74 = arith.subf %71, %73 : vector<8x8xf32>
    %cst_37 = arith.constant 9.99999996E-13 : f32
    %75 = vector.broadcast %cst_37 : f32 to vector<8x8xf32>
    %76 = arith.maximumf %74, %75 : vector<8x8xf32>
    %77 = math.sqrt %76 : vector<8x8xf32>
    %cst_38 = arith.constant -1.000000e+30 : f32
    %78 = vector.broadcast %cst_38 : f32 to vector<8x8xf32>
    %79 = arith.select %67, %77, %78 : vector<8x8xi1>, vector<8x8xf32>
    %cst_39 = arith.constant dense<0xFF800000> : vector<8xf32>
    %80 = vector.multi_reduction <maximumf>, %79, %cst_39 [1] : vector<8x8xf32> to vector<8xf32>
    %81 = vector.shape_cast %80 : vector<8xf32> to vector<8x1xf32>
    %cst_40 = arith.constant 1.000000e+30 : f32
    %82 = vector.broadcast %cst_40 : f32 to vector<8x8xf32>
    %83 = arith.select %67, %82, %77 : vector<8x8xi1>, vector<8x8xf32>
    %cst_41 = arith.constant dense<0x7F800000> : vector<8xf32>
    %84 = vector.multi_reduction <minimumf>, %83, %cst_41 [1] : vector<8x8xf32> to vector<8xf32>
    %85 = vector.shape_cast %84 : vector<8xf32> to vector<8x1xf32>
    %86 = arith.subf %81, %85 : vector<8x1xf32>
    %cst_42 = arith.constant 0.000000e+00 : f32
    %87 = vector.broadcast %cst_42 : f32 to vector<8x1xf32>
    %88 = arith.maximumf %86, %87 : vector<8x1xf32>
    %89 = vector.shape_cast %88 : vector<8x1xf32> to vector<1x8x1xf32>
    %cst_43 = arith.constant dense<0.000000e+00> : vector<1xf32>
    %90 = vector.multi_reduction <add>, %89, %cst_43 [1, 2] : vector<1x8x1xf32> to vector<1xf32>
    %91 = vector.shape_cast %90 : vector<1xf32> to vector<1x1x1xf32>
    %92 = vector.extract %91[0, 0, 0] : f32 from vector<1x1x1xf32>
    %93 = vector.broadcast %92 : f32 to vector<1x1xf32>
    %94 = vector.broadcast %62 : vector<8x1xf32> to vector<8x8xf32>
    %95 = vector.broadcast %64 : vector<1x8xf32> to vector<8x8xf32>
    %96 = arith.addf %94, %95 : vector<8x8xf32>
    %cst_44 = arith.constant 2.000000e+00 : f32
    %97 = vector.broadcast %cst_44 : f32 to vector<8x8xf32>
    %98 = arith.mulf %97, %56 : vector<8x8xf32>
    %99 = arith.subf %96, %98 : vector<8x8xf32>
    %cst_45 = arith.constant 9.99999996E-13 : f32
    %100 = vector.broadcast %cst_45 : f32 to vector<8x8xf32>
    %101 = arith.maximumf %99, %100 : vector<8x8xf32>
    %102 = math.sqrt %101 : vector<8x8xf32>
    %cst_46 = arith.constant -1.000000e+30 : f32
    %103 = vector.broadcast %cst_46 : f32 to vector<8x8xf32>
    %104 = arith.select %67, %102, %103 : vector<8x8xi1>, vector<8x8xf32>
    %cst_47 = arith.constant dense<0xFF800000> : vector<8xf32>
    %105 = vector.multi_reduction <maximumf>, %104, %cst_47 [1] : vector<8x8xf32> to vector<8xf32>
    %106 = vector.shape_cast %105 : vector<8xf32> to vector<8x1xf32>
    %cst_48 = arith.constant 1.000000e+30 : f32
    %107 = vector.broadcast %cst_48 : f32 to vector<8x8xf32>
    %108 = arith.select %67, %107, %102 : vector<8x8xi1>, vector<8x8xf32>
    %cst_49 = arith.constant dense<0x7F800000> : vector<8xf32>
    %109 = vector.multi_reduction <minimumf>, %108, %cst_49 [1] : vector<8x8xf32> to vector<8xf32>
    %110 = vector.shape_cast %109 : vector<8xf32> to vector<8x1xf32>
    %111 = arith.subf %106, %110 : vector<8x1xf32>
    %cst_50 = arith.constant 0.000000e+00 : f32
    %112 = vector.broadcast %cst_50 : f32 to vector<8x1xf32>
    %113 = arith.maximumf %111, %112 : vector<8x1xf32>
    %114 = vector.shape_cast %113 : vector<8x1xf32> to vector<1x8x1xf32>
    %cst_51 = arith.constant dense<0.000000e+00> : vector<1xf32>
    %115 = vector.multi_reduction <add>, %114, %cst_51 [1, 2] : vector<1x8x1xf32> to vector<1xf32>
    %116 = vector.shape_cast %115 : vector<1xf32> to vector<1x1x1xf32>
    %117 = vector.extract %116[0, 0, 0] : f32 from vector<1x1x1xf32>
    %118 = vector.broadcast %117 : f32 to vector<1x1xf32>
    %119 = arith.addf %93, %118 : vector<1x1xf32>
    %120 = arith.addf %68, %119 : vector<1x1xf32>
    %c0_52 = arith.constant 0 : index
    %c0_53 = arith.constant 0 : index
    %121 = vector.load %arg11[%c0_52, %c0_53] : memref<1x1xf32, #tpu.memory_space<vmem>>, vector<1x1xf32>
    tpu.vector_store %arg11[%c0_52, %c0_53], %120 {strides = array<i32>} : memref<1x1xf32, #tpu.memory_space<vmem>>, vector<1x1xf32>,
    %122 = math.rsqrt %59 : vector<8x1xf32>
    %123 = math.rsqrt %64 : vector<1x8xf32>
    %c0_i32_54 = arith.constant 0 : i32
    %124 = vector.broadcast %c0_i32_54 : i32 to vector<8x1xi32>
    %125 = arith.cmpi ne, %3, %124 : vector<8x1xi32>
    %c0_i32_55 = arith.constant 0 : i32
    %126 = vector.broadcast %c0_i32_55 : i32 to vector<1x8xi32>
    %127 = arith.cmpi ne, %4, %126 : vector<1x8xi32>
    %cst_56 = arith.constant 0.000000e+00 : f32
    %128 = vector.broadcast %cst_56 : f32 to vector<8x1xf32>
    %129 = arith.select %125, %122, %128 : vector<8x1xi1>, vector<8x1xf32>
    %cst_57 = arith.constant 0.000000e+00 : f32
    %130 = vector.broadcast %cst_57 : f32 to vector<8x1xf32>
    %131 = arith.select %125, %130, %122 : vector<8x1xi1>, vector<8x1xf32>
    %cst_58 = arith.constant 0.000000e+00 : f32
    %132 = vector.broadcast %cst_58 : f32 to vector<1x8xf32>
    %133 = arith.select %127, %123, %132 : vector<1x8xi1>, vector<1x8xf32>
    %cst_59 = arith.constant 0.000000e+00 : f32
    %134 = vector.broadcast %cst_59 : f32 to vector<1x8xf32>
    %135 = arith.select %127, %134, %123 : vector<1x8xi1>, vector<1x8xf32>
    %cst_60 = arith.constant dense<0.000000e+00> : vector<8x1xf32>
    %136 = tpu.matmul %54, %133, %cst_60 {dimension_numbers = #tpu.dot_dimension_numbers<[1], [1], [0], [0], [0, 0, 1, 0], [], []>} : vector<8x8xf32>, vector<1x8xf32>, vector<8x1xf32> -> vector<8x1xf32>
    %cst_61 = arith.constant dense<0.000000e+00> : vector<8x1xf32>
    %137 = tpu.matmul %54, %135, %cst_61 {dimension_numbers = #tpu.dot_dimension_numbers<[1], [1], [0], [0], [0, 0, 1, 0], [], []>} : vector<8x8xf32>, vector<1x8xf32>, vector<8x1xf32> -> vector<8x1xf32>
    %c0_62 = arith.constant 0 : index
    %c0_63 = arith.constant 0 : index
    %138 = vector.load %arg12[%c0_62, %c0_63] : memref<1x1xf32, #tpu.memory_space<vmem>>, vector<1x1xf32>
    %139 = arith.mulf %136, %129 : vector<8x1xf32>
    %140 = arith.mulf %137, %131 : vector<8x1xf32>
    %141 = arith.addf %139, %140 : vector<8x1xf32>
    %142 = vector.shape_cast %141 : vector<8x1xf32> to vector<1x8x1xf32>
    %cst_64 = arith.constant dense<0.000000e+00> : vector<1xf32>
    %143 = vector.multi_reduction <add>, %142, %cst_64 [1, 2] : vector<1x8x1xf32> to vector<1xf32>
    %144 = vector.shape_cast %143 : vector<1xf32> to vector<1x1x1xf32>
    %145 = vector.extract %144[0, 0, 0] : f32 from vector<1x1x1xf32>
    %146 = vector.broadcast %145 : f32 to vector<1x1xf32>
    %147 = arith.addf %138, %146 : vector<1x1xf32>
    %c0_65 = arith.constant 0 : index
    %c0_66 = arith.constant 0 : index
    %148 = vector.load %arg12[%c0_65, %c0_66] : memref<1x1xf32, #tpu.memory_space<vmem>>, vector<1x1xf32>
    tpu.vector_store %arg12[%c0_65, %c0_66], %147 {strides = array<i32>} : memref<1x1xf32, #tpu.memory_space<vmem>>, vector<1x1xf32>,
    %c0_i32_67 = arith.constant 0 : i32
    %149 = arith.cmpi eq, %arg0, %c0_i32_67 : i32
    %150 = arith.extui %149 : i1 to i32
    %c0_i32_68 = arith.constant 0 : i32
    %151 = arith.cmpi ne, %150, %c0_i32_68 : i32
    scf.if %151 {
      %c0_69 = arith.constant 0 : index
      %c0_70 = arith.constant 0 : index
      %152 = vector.load %arg10[%c0_69, %c0_70] : memref<1x1xf32, #tpu.memory_space<vmem>>, vector<1x1xf32>
      %cst_71 = arith.constant 1.000000e+00 : f32
      %153 = vector.broadcast %cst_71 : f32 to vector<1x1xf32>
      %154 = arith.maximumf %152, %153 : vector<1x1xf32>
      %c0_72 = arith.constant 0 : index
      %c0_73 = arith.constant 0 : index
      %155 = vector.load %arg9[%c0_72, %c0_73] : memref<1x1xf32, #tpu.memory_space<vmem>>, vector<1x1xf32>
      %156 = arith.divf %155, %154 : vector<1x1xf32>
      %c0_74 = arith.constant 0 : index
      %c0_75 = arith.constant 0 : index
      %157 = vector.load %arg11[%c0_74, %c0_75] : memref<1x1xf32, #tpu.memory_space<vmem>>, vector<1x1xf32>
      %cst_76 = arith.constant 1.250000e-01 : f32
      %158 = vector.broadcast %cst_76 : f32 to vector<1x1xf32>
      %159 = arith.mulf %157, %158 : vector<1x1xf32>
      %c0_77 = arith.constant 0 : index
      %c0_78 = arith.constant 0 : index
      %160 = vector.load %arg12[%c0_77, %c0_78] : memref<1x1xf32, #tpu.memory_space<vmem>>, vector<1x1xf32>
      %cst_79 = arith.constant 0.00999999977 : f32
      %161 = vector.broadcast %cst_79 : f32 to vector<1x1xf32>
      %162 = arith.subf %161, %160 : vector<1x1xf32>
      %cst_80 = arith.constant 0.000000e+00 : f32
      %163 = vector.broadcast %cst_80 : f32 to vector<1x1xf32>
      %164 = arith.maximumf %162, %163 : vector<1x1xf32>
      %cst_81 = arith.constant 2.000000e+00 : f32
      %165 = vector.broadcast %cst_81 : f32 to vector<1x1xf32>
      %166 = arith.mulf %165, %164 : vector<1x1xf32>
      %c0_82 = arith.constant 0 : index
      %167 = memref.load %arg1[%c0_82] : memref<3xf32, #tpu.memory_space<smem>>
      %168 = vector.broadcast %167 : f32 to vector<1x1xf32>
      %169 = arith.mulf %168, %156 : vector<1x1xf32>
      %c1 = arith.constant 1 : index
      %170 = memref.load %arg1[%c1] : memref<3xf32, #tpu.memory_space<smem>>
      %171 = vector.broadcast %170 : f32 to vector<1x1xf32>
      %172 = arith.mulf %171, %159 : vector<1x1xf32>
      %173 = arith.addf %169, %172 : vector<1x1xf32>
      %c2 = arith.constant 2 : index
      %174 = memref.load %arg1[%c2] : memref<3xf32, #tpu.memory_space<smem>>
      %175 = vector.broadcast %174 : f32 to vector<1x1xf32>
      %176 = arith.mulf %175, %166 : vector<1x1xf32>
      %177 = arith.addf %173, %176 : vector<1x1xf32>
      %c0_83 = arith.constant 0 : index
      %c0_84 = arith.constant 0 : index
      %178 = vector.load %arg6[%c0_83, %c0_84] : memref<1x1xf32, #tpu.memory_space<vmem>>, vector<1x1xf32>
      tpu.vector_store %arg6[%c0_83, %c0_84], %177 {strides = array<i32>} : memref<1x1xf32, #tpu.memory_space<vmem>>, vector<1x1xf32>,
    } else {
    }
    return
  }
  func.func @transform_0(%arg0: i32) -> i32 {
    %c0_i32 = arith.constant 0 : i32
    %c0_i32_0 = arith.constant 0 : i32
    return %c0_i32 : i32
  }
  func.func @transform_1(%arg0: i32) -> (i32, i32) {
    %c0_i32 = arith.constant 0 : i32
    %c0_i32_0 = arith.constant 0 : i32
    return %arg0, %c0_i32 : i32, i32
  }
  func.func @transform_2(%arg0: i32) -> (i32, i32) {
    %c0_i32 = arith.constant 0 : i32
    %c0_i32_0 = arith.constant 0 : i32
    %c0_i32_1 = arith.constant 0 : i32
    return %c0_i32, %c0_i32_0 : i32, i32
  }
  func.func @transform_3(%arg0: i32) -> (i32, i32) {
    %c0_i32 = arith.constant 0 : i32
    %c0_i32_0 = arith.constant 0 : i32
    %c0_i32_1 = arith.constant 0 : i32
    return %c0_i32, %c0_i32_0 : i32, i32
  }
  func.func @transform_4(%arg0: i32) -> (i32, i32) {
    %c0_i32 = arith.constant 0 : i32
    %c0_i32_0 = arith.constant 0 : i32
    return %arg0, %c0_i32 : i32, i32
  }
  func.func @transform_5(%arg0: i32) -> (i32, i32) {
    %c0_i32 = arith.constant 0 : i32
    %c0_i32_0 = arith.constant 0 : i32
    %c0_i32_1 = arith.constant 0 : i32
    return %c0_i32, %c0_i32_0 : i32, i32
  }
}

</mosaic_0001>

<llo_original>
// kernel: tpu_custom_call.1
$region0: #{tpu_custom_call.1}
  #allocation0 [shape = 'u32[]', space=smem, size = 0x4, offset = 0x4, fixed_abs, tag = 'smem constant byte address 0x4 - core index']
  #allocation1 [shape = 'u32[144,128]{1,0:T(1,128)}', space=vmem, size = 0x12000, scoped, tag = 'internal scratch']
  #allocation2 [shape = 'f32[1,8]{1,0:T(1,128)}', space=vmem, size = 0x200, scoped, tag = 'scratch operand']
  #allocation3 [shape = 'f32[1,8]{1,0:T(1,128)}', space=vmem, size = 0x200, scoped, tag = 'scratch operand']
  #allocation4 [shape = 'f32[1,1]{1,0:T(1,128)}', space=vmem, size = 0x200, scoped, tag = 'scratch operand']
  #allocation5 [shape = 'f32[1,1]{1,0:T(1,128)}', space=vmem, size = 0x200, scoped, tag = 'scratch operand']
  #allocation6 [shape = 'f32[1,1]{1,0:T(1,128)}', space=vmem, size = 0x200, scoped, tag = 'scratch operand']
  #allocation7 [shape = 'f32[1,1]{1,0:T(1,128)}', space=vmem, size = 0x200, scoped, tag = 'scratch operand']
  %s0 = inlined_call_operand.hbm [shape: f32[3], index: 0, kind: input, shape index: {}]
  %s1 = inlined_call_operand.hbm [shape: s32[8,1], index: 1, kind: input, shape index: {}]
  %s2 = inlined_call_operand.hbm [shape: s32[1,8], index: 2, kind: input, shape index: {}]
  %s3 = inlined_call_operand.hbm [shape: f32[16,32], index: 3, kind: input, shape index: {}]
  %s4 = inlined_call_operand.hbm [shape: f32[8,5], index: 4, kind: input, shape index: {}]
  %s5 = inlined_call_operand.hbm [shape: f32[1,1], index: 5, kind: output, shape index: {}]
  %s6 = sld [smem:[#allocation0]]
  $region58: #{tpu_custom_call.1} parent=0
    _
  %s8 = ssub.s32 1, %s6
  %s9 = scalar_select 0, %s8, %s6
  $region1: #{tpu_custom_call.1} parent=0
    #allocation8 [shape = 'u8[512]{0}', space=smem, size = 0x200, scoped, tag = 'input window, operand 0, single buffered']
    #allocation9 [shape = 's32[1]{0}', space=sflag, size = 0x4, scoped, tag = 'scoped memory for tpu_custom_call.1']
    #allocation10 [shape = 's32[1]{0}', space=sflag, size = 0x4, scoped, tag = 'scoped memory for tpu_custom_call.1']
    #allocation11 [shape = 's32[1]{0}', space=sflag, size = 0x4, scoped, tag = 'scoped memory for tpu_custom_call.1']
    #allocation12 [shape = 'u8[4096]{0}', space=vmem, size = 0x1000, scoped, tag = 'input window, operand 1, single buffered']
    #allocation13 [shape = 'u8[512]{0}', space=vmem, size = 0x400, scoped, tag = 'input window, operand 2, single buffered']
    #allocation14 [shape = 's32[1]{0}', space=sflag, size = 0x4, scoped, tag = 'scoped memory for tpu_custom_call.1']
    #allocation15 [shape = 'u8[8192]{0}', space=vmem, size = 0x2000, scoped, tag = 'input window, operand 3, single buffered']
    #allocation16 [shape = 'u8[4096]{0}', space=vmem, size = 0x1000, scoped, tag = 'input window, operand 4, single buffered']
    #allocation17 [shape = 's32[1]{0}', space=sflag, size = 0x4, scoped, tag = 'scoped memory for tpu_custom_call.1']
    #allocation18 [shape = 'u8[512]{0}', space=vmem, size = 0x400, scoped, tag = 'output window, operand 0, single buffered']
    %10 = vsyncpa [#allocation11], 0
    %11 = vsyncpa [#allocation9], 0
    %12 = vsyncpa [#allocation14], 0
    %13 = vsyncpa [#allocation17], 0
    %14 = vsyncpa [#allocation10], 0
    // Predicated region
    $region2: #{tpu_custom_call.1} parent=1 // pred_check
      _
    $region3: #{tpu_custom_call.1} parent=1 // pred_check_branch
      %16 = sbr.rel (0) target = $region5
    $region4: #{tpu_custom_call.1} parent=1 // pred_region
      %s18 = ssub.s32 16, 16
      %19 = vsyncadd [#allocation11], %s18
      %22 = dma.hbm_to_smem %s0, 16, [#allocation8], [#allocation11]
    $region5: #{tpu_custom_call.1} parent=1 // pred_fallthru
      _
    // Predicated region
    $region6: #{tpu_custom_call.1} parent=1 // pred_check
      _
    $region7: #{tpu_custom_call.1} parent=1 // pred_check_branch
      %24 = sbr.rel (0) target = $region9
    $region8: #{tpu_custom_call.1} parent=1 // pred_region
      %s26 = ssub.s32 128, 128
      %27 = vsyncadd [#allocation9], %s26
      %s29 = sshll.u32 [#allocation12], 4
      %s30 = int_to_ptr.vmem [resolvable:$true] %s29
      %32 = dma.hbm_to_vmem [thread:$0]  %s1, 128, %s30, [#allocation9]
    $region9: #{tpu_custom_call.1} parent=1 // pred_fallthru
      _
    // Predicated region
    $region10: #{tpu_custom_call.1} parent=1 // pred_check
      _
    $region11: #{tpu_custom_call.1} parent=1 // pred_check_branch
      %34 = sbr.rel (0) target = $region13
    $region12: #{tpu_custom_call.1} parent=1 // pred_region
      %s36 = ssub.s32 16, 16
      %37 = vsyncadd [#allocation14], %s36
      %s39 = sshll.u32 [#allocation13], 4
      %s40 = int_to_ptr.vmem [resolvable:$true] %s39
      %42 = dma.hbm_to_vmem [thread:$0]  %s2, 16, %s40, [#allocation14]
    $region13: #{tpu_custom_call.1} parent=1 // pred_fallthru
      _
    // Predicated region
    $region14: #{tpu_custom_call.1} parent=1 // pred_check
      _
    $region15: #{tpu_custom_call.1} parent=1 // pred_check_branch
      %44 = sbr.rel (0) target = $region17
    $region16: #{tpu_custom_call.1} parent=1 // pred_region
      %s46 = ssub.s32 256, 256
      %47 = vsyncadd [#allocation14], %s46
      %s48 = sshll.u32 [#allocation15], 4
      %s49 = int_to_ptr.vmem [resolvable:$true] %s48
      %54 = dma.hbm_to_vmem [thread:$0]  %s3, 256, %s49, [#allocation14], 128, 128, 8
    $region17: #{tpu_custom_call.1} parent=1 // pred_fallthru
      _
    // Predicated region
    $region18: #{tpu_custom_call.1} parent=1 // pred_check
      _
    $region19: #{tpu_custom_call.1} parent=1 // pred_check_branch
      %56 = sbr.rel (0) target = $region21
    $region20: #{tpu_custom_call.1} parent=1 // pred_region
      %s58 = ssub.s32 128, 128
      %59 = vsyncadd [#allocation17], %s58
      %s61 = sshll.u32 [#allocation16], 4
      %s62 = int_to_ptr.vmem [resolvable:$true] %s61
      %64 = dma.hbm_to_vmem [thread:$0]  %s4, 128, %s62, [#allocation17]
    $region21: #{tpu_custom_call.1} parent=1 // pred_fallthru
      _
    // Predicated region
    $region22: #{tpu_custom_call.1} parent=1 // pred_check
      _
    $region23: #{tpu_custom_call.1} parent=1 // pred_check_branch
      %66 = sbr.rel (0) target = $region25
    $region24: #{tpu_custom_call.1} parent=1 // pred_region
      %67 = dma.done [#allocation11], 16
    $region25: #{tpu_custom_call.1} parent=1 // pred_fallthru
      _
    // Predicated region
    $region26: #{tpu_custom_call.1} parent=1 // pred_check
      _
    $region27: #{tpu_custom_call.1} parent=1 // pred_check_branch
      %69 = sbr.rel (0) target = $region29
    $region28: #{tpu_custom_call.1} parent=1 // pred_region
      %70 = dma.done [#allocation9], 128
    $region29: #{tpu_custom_call.1} parent=1 // pred_fallthru
      _
    // Predicated region
    $region30: #{tpu_custom_call.1} parent=1 // pred_check
      _
    $region31: #{tpu_custom_call.1} parent=1 // pred_check_branch
      %72 = sbr.rel (0) target = $region33
    $region32: #{tpu_custom_call.1} parent=1 // pred_region
      %73 = dma.done [#allocation14], 16
    $region33: #{tpu_custom_call.1} parent=1 // pred_fallthru
      _
    // Predicated region
    $region34: #{tpu_custom_call.1} parent=1 // pred_check
      _
    $region35: #{tpu_custom_call.1} parent=1 // pred_check_branch
      %75 = sbr.rel (0) target = $region37
    $region36: #{tpu_custom_call.1} parent=1 // pred_region
      %76 = dma.done [#allocation14], 256
    $region37: #{tpu_custom_call.1} parent=1 // pred_fallthru
      _
    // Predicated region
    $region38: #{tpu_custom_call.1} parent=1 // pred_check
      _
    $region39: #{tpu_custom_call.1} parent=1 // pred_check_branch
      %78 = sbr.rel (0) target = $region41
    $region40: #{tpu_custom_call.1} parent=1 // pred_region
      %79 = dma.done [#allocation17], 128
    $region41: #{tpu_custom_call.1} parent=1 // pred_fallthru
      _
    %80 = sfence
    %p81 = scmp.eq.s32.totalorder 0, 0
    // Predicated region
    $region42: #{tpu_custom_call.1} parent=1 // pred_check
      %p82 = pneg %p81
    $region43: #{tpu_custom_call.1} parent=1 // pred_check_branch
      %84 = sbr.rel (%p82) target = $region45
    $region44: #{tpu_custom_call.1} parent=1 // pred_region
      %vm85 = vcmask 0
      %86 = vst.msk [vmem:[#allocation4] sm:$0x1] %vm85, 0.0
      %87 = vst.msk [vmem:[#allocation5] sm:$0x1] %vm85, 0.0
      %88 = vst.msk [vmem:[#allocation6] sm:$0x1] %vm85, 0.0
      %89 = vst.msk [vmem:[#allocation7] sm:$0x1] %vm85, 0.0
      %v90 = vld [vmem:[#allocation15] sm:$0xff]
      %v91 = vld [vmem:[#allocation15 + $0x8] sm:$0xff]
      %v92 = vmul.f32 %v90, %v90
      %v93 = vmul.f32 %v91, %v91
      %vm94 = vcmask 261120
      %v96 = vsel %vm94, 1.0, 0
      %v99 = vsel %vm94, %v92, 0
      %101 = vmatprep.subr.mxu0 0.0
      %102 = vmatpush1.xpose.msra.mxu0 %v99
      %103 = vmatprep.subr.mxu0 0.0
      %104 = vmatpush1.xpose.msra.mxu0 0.0
      %105 = vmatprep.subr.mxu0 0.0
      %106 = vmatpush1.xpose.msra.mxu0 0.0
      %107 = vmatprep.subr.mxu0 0.0
      %108 = vmatpush1.xpose.msra.mxu0 0.0
      %109 = vmatprep.subr.mxu0 0.0
      %110 = vmatpush1.xpose.msra.mxu0 0.0
      %111 = vmatprep.subr.mxu0 0.0
      %112 = vmatpush1.xpose.msra.mxu0 0.0
      %113 = vmatprep.subr.mxu0 0.0
      %114 = vmatpush1.xpose.msra.mxu0 0.0
      %115 = vmatprep.subr.mxu0 0.0
      %116 = vmatpush1.xpose.msra.mxu0 0.0
      %117 = vmatprep.subr.mxu0 0.0
      %118 = vmatpush1.xpose.msra.mxu0 0.0
      %119 = vmatprep.subr.mxu0 0.0
      %120 = vmatpush1.xpose.msra.mxu0 0.0
      %121 = vmatprep.subr.mxu0 0.0
      %122 = vmatpush1.xpose.msra.mxu0 0.0
      %123 = vmatprep.subr.mxu0 0.0
      %124 = vmatpush1.xpose.msra.mxu0 0.0
      %125 = vmatprep.subr.mxu0 0.0
      %126 = vmatpush1.xpose.msra.mxu0 0.0
      %127 = vmatprep.subr.mxu0 0.0
      %128 = vmatpush1.xpose.msra.mxu0 0.0
      %129 = vmatprep.subr.mxu0 0.0
      %130 = vmatpush1.xpose.msra.mxu0 0.0
      %131 = vmatprep.subr.mxu0 0.0
      %132 = vmatpush1.xpose.msra.mxu0 0.0
      %133 = vmatprep.subr.mxu0 0.0
      %134 = vmatpush1.xpose.msra.mxu0 0.0
      %135 = vmatprep.subr.mxu0 0.0
      %136 = vmatpush1.xpose.msra.mxu0 0.0
      %137 = vmatprep.subr.mxu0 0.0
      %138 = vmatpush1.xpose.msra.mxu0 0.0
      %139 = vmatprep.subr.mxu0 0.0
      %140 = vmatpush1.xpose.msra.mxu0 0.0
      %141 = vmatprep.subr.mxu0 0.0
      %142 = vmatpush1.xpose.msra.mxu0 0.0
      %143 = vmatprep.subr.mxu0 0.0
      %144 = vmatpush1.xpose.msra.mxu0 0.0
      %145 = vmatprep.subr.mxu0 0.0
      %146 = vmatpush1.xpose.msra.mxu0 0.0
      %147 = vmatprep.subr.mxu0 0.0
      %148 = vmatpush1.xpose.msra.mxu0 0.0
      %149 = vmatprep.subr.mxu0 0.0
      %150 = vmatpush1.xpose.msra.mxu0 0.0
      %151 = vmatprep.subr.mxu0 0.0
      %152 = vmatpush1.xpose.msra.mxu0 0.0
      %153 = vmatprep.subr.mxu0 0.0
      %154 = vmatpush1.xpose.msra.mxu0 0.0
      %155 = vmatprep.subr.mxu0 0.0
      %156 = vmatpush1.xpose.msra.mxu0 0.0
      %157 = vmatprep.subr.mxu0 0.0
      %158 = vmatpush1.xpose.msra.mxu0 0.0
      %159 = vmatprep.subr.mxu0 0.0
      %160 = vmatpush1.xpose.msra.mxu0 0.0
      %161 = vmatprep.subr.mxu0 0.0
      %162 = vmatpush1.xpose.msra.mxu0 0.0
      %163 = vmatprep.subr.mxu0 0.0
      %164 = vmatpush1.xpose.msra.mxu0 0.0
      %165 = vmatprep.mubr.f32.mxu0 0.0
      %166 = vmatmul.mubr.f32.gmra.mrb[0].mxu0 %v96
      %v167 = vpop.f32.mrb[0].mxu0
      %v168 = vadd.f32 0.0, %v167
      %v169 = vpop.f32.mrb[0].mxu0
      %170 = vdwg.mxu0
      %vm171 = vcmask 57344
      %172 = vst.msk [vmem:[#allocation2] sm:$0x1] %vm171, %v168
      %v174 = vsel %vm94, %v93, 0
      %176 = vmatprep.subr.mxu0 0.0
      %177 = vmatpush1.xpose.msra.mxu0 %v174
      %178 = vmatprep.subr.mxu0 0.0
      %179 = vmatpush1.xpose.msra.mxu0 0.0
      %180 = vmatprep.subr.mxu0 0.0
      %181 = vmatpush1.xpose.msra.mxu0 0.0
      %182 = vmatprep.subr.mxu0 0.0
      %183 = vmatpush1.xpose.msra.mxu0 0.0
      %184 = vmatprep.subr.mxu0 0.0
      %185 = vmatpush1.xpose.msra.mxu0 0.0
      %186 = vmatprep.subr.mxu0 0.0
      %187 = vmatpush1.xpose.msra.mxu0 0.0
      %188 = vmatprep.subr.mxu0 0.0
      %189 = vmatpush1.xpose.msra.mxu0 0.0
      %190 = vmatprep.subr.mxu0 0.0
      %191 = vmatpush1.xpose.msra.mxu0 0.0
      %192 = vmatprep.subr.mxu0 0.0
      %193 = vmatpush1.xpose.msra.mxu0 0.0
      %194 = vmatprep.subr.mxu0 0.0
      %195 = vmatpush1.xpose.msra.mxu0 0.0
      %196 = vmatprep.subr.mxu0 0.0
      %197 = vmatpush1.xpose.msra.mxu0 0.0
      %198 = vmatprep.subr.mxu0 0.0
      %199 = vmatpush1.xpose.msra.mxu0 0.0
      %200 = vmatprep.subr.mxu0 0.0
      %201 = vmatpush1.xpose.msra.mxu0 0.0
      %202 = vmatprep.subr.mxu0 0.0
      %203 = vmatpush1.xpose.msra.mxu0 0.0
      %204 = vmatprep.subr.mxu0 0.0
      %205 = vmatpush1.xpose.msra.mxu0 0.0
      %206 = vmatprep.subr.mxu0 0.0
      %207 = vmatpush1.xpose.msra.mxu0 0.0
      %208 = vmatprep.subr.mxu0 0.0
      %209 = vmatpush1.xpose.msra.mxu0 0.0
      %210 = vmatprep.subr.mxu0 0.0
      %211 = vmatpush1.xpose.msra.mxu0 0.0
      %212 = vmatprep.subr.mxu0 0.0
      %213 = vmatpush1.xpose.msra.mxu0 0.0
      %214 = vmatprep.subr.mxu0 0.0
      %215 = vmatpush1.xpose.msra.mxu0 0.0
      %216 = vmatprep.subr.mxu0 0.0
      %217 = vmatpush1.xpose.msra.mxu0 0.0
      %218 = vmatprep.subr.mxu0 0.0
      %219 = vmatpush1.xpose.msra.mxu0 0.0
      %220 = vmatprep.subr.mxu0 0.0
      %221 = vmatpush1.xpose.msra.mxu0 0.0
      %222 = vmatprep.subr.mxu0 0.0
      %223 = vmatpush1.xpose.msra.mxu0 0.0
      %224 = vmatprep.subr.mxu0 0.0
      %225 = vmatpush1.xpose.msra.mxu0 0.0
      %226 = vmatprep.subr.mxu0 0.0
      %227 = vmatpush1.xpose.msra.mxu0 0.0
      %228 = vmatprep.subr.mxu0 0.0
      %229 = vmatpush1.xpose.msra.mxu0 0.0
      %230 = vmatprep.subr.mxu0 0.0
      %231 = vmatpush1.xpose.msra.mxu0 0.0
      %232 = vmatprep.subr.mxu0 0.0
      %233 = vmatpush1.xpose.msra.mxu0 0.0
      %234 = vmatprep.subr.mxu0 0.0
      %235 = vmatpush1.xpose.msra.mxu0 0.0
      %236 = vmatprep.subr.mxu0 0.0
      %237 = vmatpush1.xpose.msra.mxu0 0.0
      %238 = vmatprep.subr.mxu0 0.0
      %239 = vmatpush1.xpose.msra.mxu0 0.0
      %240 = vmatprep.mubr.f32.mxu0 0.0
      %241 = vmatmul.mubr.f32.gmra.mrb[0].mxu0 %v96
      %v242 = vpop.f32.mrb[0].mxu0
      %v243 = vadd.f32 0.0, %v242
      %v244 = vpop.f32.mrb[0].mxu0
      %245 = vdwg.mxu0
      %246 = vst.msk [vmem:[#allocation3] sm:$0x1] %vm171, %v243
    $region45: #{tpu_custom_call.1} parent=1 // pred_fallthru
      _
    %v247 = vld [vmem:[#allocation12] sm:$0xff]
    %v248 = vld [vmem:[#allocation13] sm:$0x1]
    %v249 = vld [vmem:[#allocation16] sm:$0xff]
    %vm250 = vcmask 39936
    %v251 = vsel %vm250, %v249, -inf
    %252 = vmax.xlane.f32.xlu0 %v251
    %v253 = vpop.xlane.xlu0 %252
    %v254 = vsub.f32 %v249, %v253
    %v255 = vmul.f32 %v254, 1.442695
    %v256 = vpow.pop %v255
    %v257 = vsel %vm250, %v256, 0.0
    %258 = vadd.xlane.f32.xlu0 %v257
    %v259 = vpop.xlane.xlu0 %258
    %v260 = vlog2.pop %v259
    %v261 = vmul.f32 %v260, 0.6931472
    %v262 = vadd.f32 %v253, %v261
    %v263 = vlaneseq
    %v264 = vand.u32 %v263, 127
    %265 = vset.pattern.permute.xlu0 0
    %266 = vperm.xlu0 %265, %v247
    %v267 = vpop.permute.xlu0 %266
    %vm268 = vcmp.eq.s32.totalorder %v264, %v267
    %v269 = vsel %vm268, %v249, 0.0
    %v270 = vsel %vm250, %v269, 0.0
    %271 = vadd.xlane.f32.xlu0 %v270
    %v272 = vpop.xlane.xlu0 %271
    %vm273 = vcmp.ne.s32.totalorder %v247, 0
    %v274 = vsel %vm273, 1, 0
    %v275 = vcvt.s32.f32 %v274
    %v276 = vld [vmem:[#allocation4] sm:$0x1]
    %v277 = vsub.f32 %v262, %v272
    %v278 = vmul.f32 %v277, %v275
    %vm279 = vcmask 7168
    %v280 = vsel %vm279, %v278, 0.0
    %281 = vadd.xlane.f32.xlu0 %v280
    %v282 = vpop.xlane.xlu0 %281
    %v283 = vrot.slane %v282, 4
    %v284 = vadd.f32 %v282, %v283
    %v285 = vrot.slane %v284, 2
    %v286 = vadd.f32 %v284, %v285
    %v287 = vrot.slane %v286, 1
    %v288 = vadd.f32 %v286, %v287
    %s289 = vtos %v288
    %v290 = vstv %s289
    %v291 = vadd.f32 %v276, %v290
    %vm292 = vcmask 0
    %293 = vst.msk [vmem:[#allocation4] sm:$0x1] %vm292, %v291
    %v294 = vld [vmem:[#allocation5] sm:$0x1]
    %v295 = vsel %vm279, %v275, 0.0
    %296 = vadd.xlane.f32.xlu0 %v295
    %v297 = vpop.xlane.xlu0 %296
    %v298 = vrot.slane %v297, 4
    %v299 = vadd.f32 %v297, %v298
    %v300 = vrot.slane %v299, 2
    %v301 = vadd.f32 %v299, %v300
    %v302 = vrot.slane %v301, 1
    %v303 = vadd.f32 %v301, %v302
    %s304 = vtos %v303
    %v305 = vstv %s304
    %v306 = vadd.f32 %v294, %v305
    %307 = vst.msk [vmem:[#allocation5] sm:$0x1] %vm292, %v306
    %s308 = smul.u32 0, 8
    %s309 = scalar_lea.vmem [#allocation15], %s308
    %v310 = vld [vmem:[%s309] sm:$0xff]
    %s311 = sadd.s32 %s308, 8
    %s312 = scalar_lea.vmem [#allocation15], %s311
    %v313 = vld [vmem:[%s312] sm:$0xff]
    %v314 = vld [vmem:[#allocation15] sm:$0xff]
    %v315 = vld [vmem:[#allocation15 + $0x8] sm:$0xff]
    %vm316 = vcmask 261120
    %v318 = vsel %vm316, %v310, 0
    %v321 = vsel %vm316, %v314, 0
    %v324 = vsel %vm316, %v315, 0
    %326 = vmatprep.subr.mxu0 0.0
    %327 = vmatpush1.xpose.msra.mxu0 %v321
    %328 = vmatprep.subr.mxu0 0.0
    %329 = vmatpush1.xpose.msra.mxu0 %v324
    %330 = vmatprep.subr.mxu0 0.0
    %331 = vmatpush1.xpose.msra.mxu0 0.0
    %332 = vmatprep.subr.mxu0 0.0
    %333 = vmatpush1.xpose.msra.mxu0 0.0
    %334 = vmatprep.subr.mxu0 0.0
    %335 = vmatpush1.xpose.msra.mxu0 0.0
    %336 = vmatprep.subr.mxu0 0.0
    %337 = vmatpush1.xpose.msra.mxu0 0.0
    %338 = vmatprep.subr.mxu0 0.0
    %339 = vmatpush1.xpose.msra.mxu0 0.0
    %340 = vmatprep.subr.mxu0 0.0
    %341 = vmatpush1.xpose.msra.mxu0 0.0
    %342 = vmatprep.subr.mxu0 0.0
    %343 = vmatpush1.xpose.msra.mxu0 0.0
    %344 = vmatprep.subr.mxu0 0.0
    %345 = vmatpush1.xpose.msra.mxu0 0.0
    %346 = vmatprep.subr.mxu0 0.0
    %347 = vmatpush1.xpose.msra.mxu0 0.0
    %348 = vmatprep.subr.mxu0 0.0
    %349 = vmatpush1.xpose.msra.mxu0 0.0
    %350 = vmatprep.subr.mxu0 0.0
    %351 = vmatpush1.xpose.msra.mxu0 0.0
    %352 = vmatprep.subr.mxu0 0.0
    %353 = vmatpush1.xpose.msra.mxu0 0.0
    %354 = vmatprep.subr.mxu0 0.0
    %355 = vmatpush1.xpose.msra.mxu0 0.0
    %356 = vmatprep.subr.mxu0 0.0
    %357 = vmatpush1.xpose.msra.mxu0 0.0
    %358 = vmatprep.subr.mxu0 0.0
    %359 = vmatpush1.xpose.msra.mxu0 0.0
    %360 = vmatprep.subr.mxu0 0.0
    %361 = vmatpush1.xpose.msra.mxu0 0.0
    %362 = vmatprep.subr.mxu0 0.0
    %363 = vmatpush1.xpose.msra.mxu0 0.0
    %364 = vmatprep.subr.mxu0 0.0
    %365 = vmatpush1.xpose.msra.mxu0 0.0
    %366 = vmatprep.subr.mxu0 0.0
    %367 = vmatpush1.xpose.msra.mxu0 0.0
    %368 = vmatprep.subr.mxu0 0.0
    %369 = vmatpush1.xpose.msra.mxu0 0.0
    %370 = vmatprep.subr.mxu0 0.0
    %371 = vmatpush1.xpose.msra.mxu0 0.0
    %372 = vmatprep.subr.mxu0 0.0
    %373 = vmatpush1.xpose.msra.mxu0 0.0
    %374 = vmatprep.subr.mxu0 0.0
    %375 = vmatpush1.xpose.msra.mxu0 0.0
    %376 = vmatprep.subr.mxu0 0.0
    %377 = vmatpush1.xpose.msra.mxu0 0.0
    %378 = vmatprep.subr.mxu0 0.0
    %379 = vmatpush1.xpose.msra.mxu0 0.0
    %380 = vmatprep.subr.mxu0 0.0
    %381 = vmatpush1.xpose.msra.mxu0 0.0
    %382 = vmatprep.subr.mxu0 0.0
    %383 = vmatpush1.xpose.msra.mxu0 0.0
    %384 = vmatprep.subr.mxu0 0.0
    %385 = vmatpush1.xpose.msra.mxu0 0.0
    %386 = vmatprep.subr.mxu0 0.0
    %387 = vmatpush1.xpose.msra.mxu0 0.0
    %388 = vmatprep.subr.mxu0 0.0
    %389 = vmatpush1.xpose.msra.mxu0 0.0
    %390 = vmatprep.mubr.f32.mxu0 0.0
    %391 = vmatmul.mubr.f32.gmra.mrb[0].mxu0 %v318
    %v392 = vpop.f32.mrb[0].mxu0
    %v393 = vadd.f32 0.0, %v392
    %v394 = vpop.f32.mrb[0].mxu0
    %395 = vdwg.mxu0
    %v397 = vsel %vm316, %v313, 0
    %399 = vmatprep.subr.mxu0 0.0
    %400 = vmatpush1.xpose.msra.mxu0 %v324
    %401 = vmatprep.subr.mxu0 0.0
    %402 = vmatpush1.xpose.msra.mxu0 0.0
    %403 = vmatprep.subr.mxu0 0.0
    %404 = vmatpush1.xpose.msra.mxu0 0.0
    %405 = vmatprep.subr.mxu0 0.0
    %406 = vmatpush1.xpose.msra.mxu0 0.0
    %407 = vmatprep.subr.mxu0 0.0
    %408 = vmatpush1.xpose.msra.mxu0 0.0
    %409 = vmatprep.subr.mxu0 0.0
    %410 = vmatpush1.xpose.msra.mxu0 0.0
    %411 = vmatprep.subr.mxu0 0.0
    %412 = vmatpush1.xpose.msra.mxu0 0.0
    %413 = vmatprep.subr.mxu0 0.0
    %414 = vmatpush1.xpose.msra.mxu0 0.0
    %415 = vmatprep.subr.mxu0 0.0
    %416 = vmatpush1.xpose.msra.mxu0 0.0
    %417 = vmatprep.subr.mxu0 0.0
    %418 = vmatpush1.xpose.msra.mxu0 0.0
    %419 = vmatprep.subr.mxu0 0.0
    %420 = vmatpush1.xpose.msra.mxu0 0.0
    %421 = vmatprep.subr.mxu0 0.0
    %422 = vmatpush1.xpose.msra.mxu0 0.0
    %423 = vmatprep.subr.mxu0 0.0
    %424 = vmatpush1.xpose.msra.mxu0 0.0
    %425 = vmatprep.subr.mxu0 0.0
    %426 = vmatpush1.xpose.msra.mxu0 0.0
    %427 = vmatprep.subr.mxu0 0.0
    %428 = vmatpush1.xpose.msra.mxu0 0.0
    %429 = vmatprep.subr.mxu0 0.0
    %430 = vmatpush1.xpose.msra.mxu0 0.0
    %431 = vmatprep.subr.mxu0 0.0
    %432 = vmatpush1.xpose.msra.mxu0 0.0
    %433 = vmatprep.subr.mxu0 0.0
    %434 = vmatpush1.xpose.msra.mxu0 0.0
    %435 = vmatprep.subr.mxu0 0.0
    %436 = vmatpush1.xpose.msra.mxu0 0.0
    %437 = vmatprep.subr.mxu0 0.0
    %438 = vmatpush1.xpose.msra.mxu0 0.0
    %439 = vmatprep.subr.mxu0 0.0
    %440 = vmatpush1.xpose.msra.mxu0 0.0
    %441 = vmatprep.subr.mxu0 0.0
    %442 = vmatpush1.xpose.msra.mxu0 0.0
    %443 = vmatprep.subr.mxu0 0.0
    %444 = vmatpush1.xpose.msra.mxu0 0.0
    %445 = vmatprep.subr.mxu0 0.0
    %446 = vmatpush1.xpose.msra.mxu0 0.0
    %447 = vmatprep.subr.mxu0 0.0
    %448 = vmatpush1.xpose.msra.mxu0 0.0
    %449 = vmatprep.subr.mxu0 0.0
    %450 = vmatpush1.xpose.msra.mxu0 0.0
    %451 = vmatprep.subr.mxu0 0.0
    %452 = vmatpush1.xpose.msra.mxu0 0.0
    %453 = vmatprep.subr.mxu0 0.0
    %454 = vmatpush1.xpose.msra.mxu0 0.0
    %455 = vmatprep.subr.mxu0 0.0
    %456 = vmatpush1.xpose.msra.mxu0 0.0
    %457 = vmatprep.subr.mxu0 0.0
    %458 = vmatpush1.xpose.msra.mxu0 0.0
    %459 = vmatprep.subr.mxu0 0.0
    %460 = vmatpush1.xpose.msra.mxu0 0.0
    %461 = vmatprep.subr.mxu0 0.0
    %462 = vmatpush1.xpose.msra.mxu0 0.0
    %463 = vmatprep.mubr.f32.mxu0 0.0
    %464 = vmatmul.mubr.f32.gmra.mrb[0].mxu0 %v397
    %v465 = vpop.f32.mrb[0].mxu0
    %v466 = vadd.f32 0.0, %v465
    %v467 = vpop.f32.mrb[0].mxu0
    %468 = vdwg.mxu0
    %v469 = vmul.f32 %v310, %v310
    %v470 = vsel %vm316, %v469, 0.0
    %471 = vadd.xlane.f32.xlu0 %v470
    %v472 = vpop.xlane.xlu0 %471
    %v473 = vmul.f32 %v313, %v313
    %v474 = vsel %vm316, %v473, 0.0
    %475 = vadd.xlane.f32.xlu0 %v474
    %v476 = vpop.xlane.xlu0 %475
    %v477 = vld [vmem:[#allocation2] sm:$0x1]
    %v478 = vld [vmem:[#allocation3] sm:$0x1]
    %v479 = vlaneseq
    %v480 = vshrl.u32 %v479, 7
    %v481 = vsub.s32 0, %v480
    %v482 = vrot.slane %v248, %v481
    %vm483 = vcmp.eq.s32.totalorder %v267, %v482
    %v484 = vld [vmem:[#allocation6] sm:$0x1]
    %v486 = vlaneseq
    %v487 = vshrl.u32 %v486, 7
    %v488 = vsub.s32 0, %v487
    %v489 = vrot.slane %v477, %v488
    %v491 = vadd.f32 %v472, %v489
    %v492 = vmul.f32 %v393, 2.0
    %v493 = vsub.f32 %v491, %v492
    %v494 = vmax.f32 %v493, 1e-12
    %v495 = vrsqrt.pop %v494
    %v496 = vmul.f32 %v494, %v495
    %vm497 = vcmp.eq.f32.partialorder %v494, inf
    %v498 = vsel %vm497, %v494, %v496
    %vm499 = vcmp.eq.f32.partialorder %v494, 0.0
    %v500 = vand.u32 %v494, 2147483648
    %v501 = vsel %vm499, %v500, %v498
    %v502 = vsel %vm483, %v501, -1e+30
    %vm503 = vcmask 64512
    %v504 = vsel %vm503, %v502, -inf
    %505 = vmax.xlane.f32.xlu0 %v504
    %v506 = vpop.xlane.xlu0 %505
    %v507 = vsel %vm483, 1e+30, %v501
    %v508 = vsel %vm503, %v507, inf
    %509 = vmin.xlane.f32.xlu0 %v508
    %v510 = vpop.xlane.xlu0 %509
    %v511 = vsub.f32 %v506, %v510
    %v512 = vmax.f32 %v511, 0.0
    %v513 = vsel %vm279, %v512, 0.0
    %514 = vadd.xlane.f32.xlu0 %v513
    %v515 = vpop.xlane.xlu0 %514
    %v516 = vrot.slane %v515, 4
    %v517 = vadd.f32 %v515, %v516
    %v518 = vrot.slane %v517, 2
    %v519 = vadd.f32 %v517, %v518
    %v520 = vrot.slane %v519, 1
    %v521 = vadd.f32 %v519, %v520
    %s522 = vtos %v521
    %v523 = vstv %s522
    %v525 = vlaneseq
    %v526 = vshrl.u32 %v525, 7
    %v527 = vsub.s32 0, %v526
    %v528 = vrot.slane %v478, %v527
    %v530 = vadd.f32 %v476, %v528
    %v531 = vmul.f32 %v466, 2.0
    %v532 = vsub.f32 %v530, %v531
    %v533 = vmax.f32 %v532, 1e-12
    %v534 = vrsqrt.pop %v533
    %v535 = vmul.f32 %v533, %v534
    %vm536 = vcmp.eq.f32.partialorder %v533, inf
    %v537 = vsel %vm536, %v533, %v535
    %vm538 = vcmp.eq.f32.partialorder %v533, 0.0
    %v539 = vand.u32 %v533, 2147483648
    %v540 = vsel %vm538, %v539, %v537
    %v541 = vsel %vm483, %v540, -1e+30
    %v542 = vsel %vm503, %v541, -inf
    %543 = vmax.xlane.f32.xlu0 %v542
    %v544 = vpop.xlane.xlu0 %543
    %v545 = vsel %vm483, 1e+30, %v540
    %v546 = vsel %vm503, %v545, inf
    %547 = vmin.xlane.f32.xlu0 %v546
    %v548 = vpop.xlane.xlu0 %547
    %v549 = vsub.f32 %v544, %v548
    %v550 = vmax.f32 %v549, 0.0
    %v551 = vsel %vm279, %v550, 0.0
    %552 = vadd.xlane.f32.xlu0 %v551
    %v553 = vpop.xlane.xlu0 %552
    %v554 = vrot.slane %v553, 4
    %v555 = vadd.f32 %v553, %v554
    %v556 = vrot.slane %v555, 2
    %v557 = vadd.f32 %v555, %v556
    %v558 = vrot.slane %v557, 1
    %v559 = vadd.f32 %v557, %v558
    %s560 = vtos %v559
    %v561 = vstv %s560
    %v562 = vadd.f32 %v523, %v561
    %v563 = vadd.f32 %v484, %v562
    %564 = vst.msk [vmem:[#allocation6] sm:$0x1] %vm292, %v563
    %v565 = vrsqrt.pop %v472
    %v566 = vrsqrt.pop %v478
    %vm567 = vcmp.ne.s32.totalorder %v248, 0
    %v568 = vsel %vm273, %v565, 0.0
    %v569 = vsel %vm273, 0.0, %v565
    %v570 = vsel %vm567, %v566, 0.0
    %v571 = vsel %vm567, 0.0, %v566
    %v573 = vlaneseq
    %v574 = vshrl.u32 %v573, 7
    %v575 = vsub.s32 0, %v574
    %v576 = vrot.slane %v570, %v575
    %577 = vrot.lane.b32.xlu0 %v576, 8
    %v578 = vpop.permute.xlu0 %577
    %v580 = vmul.f32 %v393, %v578
    %582 = vrot.lane.b32.xlu0 %v580, 120
    %v583 = vpop.permute.xlu0 %582
    %v585 = vsel %vm503, %v583, 0.0
    %586 = vadd.xlane.f32.xlu0 %v585
    %v587 = vpop.xlane.xlu0 %586
    %v589 = vlaneseq
    %v590 = vshrl.u32 %v589, 7
    %v591 = vsub.s32 0, %v590
    %v592 = vrot.slane %v571, %v591
    %593 = vrot.lane.b32.xlu0 %v592, 8
    %v594 = vpop.permute.xlu0 %593
    %v596 = vmul.f32 %v393, %v594
    %598 = vrot.lane.b32.xlu0 %v596, 120
    %v599 = vpop.permute.xlu0 %598
    %v601 = vsel %vm503, %v599, 0.0
    %602 = vadd.xlane.f32.xlu0 %v601
    %v603 = vpop.xlane.xlu0 %602
    %v604 = vld [vmem:[#allocation7] sm:$0x1]
    %v605 = vmul.f32 %v587, %v568
    %v606 = vmul.f32 %v603, %v569
    %v607 = vadd.f32 %v605, %v606
    %v608 = vsel %vm279, %v607, 0.0
    %609 = vadd.xlane.f32.xlu0 %v608
    %v610 = vpop.xlane.xlu0 %609
    %v611 = vrot.slane %v610, 4
    %v612 = vadd.f32 %v610, %v611
    %v613 = vrot.slane %v612, 2
    %v614 = vadd.f32 %v612, %v613
    %v615 = vrot.slane %v614, 1
    %v616 = vadd.f32 %v614, %v615
    %s617 = vtos %v616
    %v618 = vstv %s617
    %v619 = vadd.f32 %v604, %v618
    %620 = vst.msk [vmem:[#allocation7] sm:$0x1] %vm292, %v619
    // Predicated region
    $region46: #{tpu_custom_call.1} parent=1 // pred_check
      %p621 = pneg %p81
    $region47: #{tpu_custom_call.1} parent=1 // pred_check_branch
      %623 = sbr.rel (%p621) target = $region49
    $region48: #{tpu_custom_call.1} parent=1 // pred_region
      %v624 = vld [vmem:[#allocation5] sm:$0x1]
      %v625 = vmax.f32 %v624, 1.0
      %v626 = vld [vmem:[#allocation4] sm:$0x1]
      %v627 = vrcp.pop %v625
      %v628 = vmul.f32 %v626, %v627
      %v629 = vld [vmem:[#allocation6] sm:$0x1]
      %v630 = vmul.f32 %v629, 0.125
      %v631 = vld [vmem:[#allocation7] sm:$0x1]
      %v632 = vsub.f32 0.01, %v631
      %v633 = vmax.f32 %v632, 0.0
      %v634 = vmul.f32 %v633, 2.0
      %s635 = sld [smem:[#allocation8]]
      %v636 = vstv %s635
      %v637 = vmul.f32 %v636, %v628
      %s638 = sld [smem:[#allocation8 + $0x1]]
      %v639 = vstv %s638
      %v640 = vmul.f32 %v639, %v630
      %v641 = vadd.f32 %v637, %v640
      %s642 = sld [smem:[#allocation8 + $0x2]]
      %v643 = vstv %s642
      %v644 = vmul.f32 %v643, %v634
      %v645 = vadd.f32 %v641, %v644
      %646 = vst.msk [vmem:[#allocation18] sm:$0x1] %vm292, %v645
    $region49: #{tpu_custom_call.1} parent=1 // pred_fallthru
      _
    // Predicated region
    $region50: #{tpu_custom_call.1} parent=1 // pred_check
      _
    $region51: #{tpu_custom_call.1} parent=1 // pred_check_branch
      %648 = sbr.rel (0) target = $region53
    $region52: #{tpu_custom_call.1} parent=1 // pred_region
      %s650 = ssub.s32 16, 16
      %651 = vsyncadd [#allocation10], %s650
      %s653 = sshll.u32 [#allocation18], 4
      %s654 = int_to_ptr.vmem [resolvable:$true] %s653
      %656 = dma.vmem_to_hbm [thread:$0]  %s654, 16, %s5, [#allocation10]
    $region53: #{tpu_custom_call.1} parent=1 // pred_fallthru
      _
    // Predicated region
    $region54: #{tpu_custom_call.1} parent=1 // pred_check
      _
    $region55: #{tpu_custom_call.1} parent=1 // pred_check_branch
      %658 = sbr.rel (0) target = $region57
    $region56: #{tpu_custom_call.1} parent=1 // pred_region
      %659 = dma.done [#allocation10], 16
    $region57: #{tpu_custom_call.1} parent=1 // pred_fallthru
      _
    %660 = vsyncpa [#allocation9], 1
    %661 = vsyncpa [#allocation14], 1
    %662 = vsyncpa [#allocation17], 1
    %663 = vsyncpa [#allocation10], 1
    %664 = vsyncpa [#allocation11], 1

</llo_original>
